<compile_context>
chip_gen: v5e
topology: v5e:2x2
jax: 0.10.0
libtpu: 0.0.40
codegen_flags: <defaults>
</compile_context>

<pallas_src>
import jax
import jax.numpy as jnp
from jax.experimental import pallas as pl
from jax.experimental.pallas import tpu as pltpu

F_PAD = 128      # n_features padded
D_PAD = 128      # dim (95) padded
D2_PAD = 256     # 2*dim (190) padded
HID_PAD = 128    # 3 * dim5 (36) padded
OUT_PAD = 128    # output slab lane width (heads in lanes 0..2)
G_SUB = 8        # graph axis padded to a full sublane group
VSLAB_ROWS = 16  # f32 vector slab rows


def _round_up(x, m):
    return ((x + m - 1) // m) * m


def gin_att_kernel(x_ref, adj_ref, pool_ref, w_ref, v_ref, out_ref):
    f32 = jnp.float32
    bf16 = jnp.bfloat16

    # ---- carve the bf16 weight slab (static row slices; 128-row aligned) ----
    w1a    = w_ref[0:128, :]
    w1b    = w_ref[128:256, :]
    gat_w  = w_ref[256:384, :]
    fc1_wa = w_ref[384:512, :]
    fc1_wb = w_ref[512:640, :]
    hw1_a  = w_ref[640:768, :]
    hw1_b  = w_ref[768:896, :]
    hw2    = w_ref[896:1024, :]

    # ---- carve the f32 bias / vector slab ----
    vecs = v_ref[...]                       # (16, 128) f32
    b1a, b1b     = vecs[0:1], vecs[1:2]
    bn_g, bn_b   = vecs[2:3], vecs[3:4]
    gat_asrc     = vecs[4:5]
    gat_adst     = vecs[5:6]
    gat_bias     = vecs[6:7]
    fc1_ba, fc1_bb = vecs[7:8], vecs[8:9]
    hb1, hb2     = vecs[9:10], vecs[10:11]

    x = x_ref[...]                          # (N, 128) f32
    adj = adj_ref[...]                      # (N, N) bf16 (exact 0/1)

    # ---- GINConv: nn1((1 + eps) * x_i + sum_{j -> i} x_j), eps = 0 ----
    agg = jnp.dot(adj, x.astype(bf16), preferred_element_type=f32)
    h = x + agg
    h = jnp.dot(h.astype(bf16), w1a, preferred_element_type=f32) + b1a
    h = jnp.maximum(h, 0.0)
    h = jnp.dot(h.astype(bf16), w1b, preferred_element_type=f32) + b1b
    h = jnp.maximum(h, 0.0)                 # F.relu(conv1(...))

    # ---- BatchNorm1d (training-mode batch statistics), one-pass moments ----
    mean = jnp.mean(h, axis=0, keepdims=True)
    msq = jnp.mean(h * h, axis=0, keepdims=True)
    var = jnp.maximum(msq - mean * mean, 0.0)
    scale = bn_g * jax.lax.rsqrt(var + 1e-5)
    shift = bn_b - mean * scale
    h = h * scale + shift

    # ---- GATConv (heads=1, add_self_loops=True, negative_slope=0.2) ----
    hg = jnp.dot(h.astype(bf16), gat_w, preferred_element_type=f32)     # (N, D)
    # Both attention scores as tiny MXU contractions over the lane axis.
    s_dst = jax.lax.dot_general(hg, gat_adst, (((1,), (1,)), ((), ())),
                                preferred_element_type=f32)             # (N, 1)
    s_src = jax.lax.dot_general(gat_asrc, hg, (((1,), (1,)), ((), ())),
                                preferred_element_type=f32)             # (1, N)
    e = s_dst + s_src                                                   # (N_tgt, N_src)
    e = jnp.where(e > 0, e, 0.2 * e)                                    # LeakyReLU(0.2)
    n = adj.shape[0]
    row = jax.lax.broadcasted_iota(jnp.int32, (n, n), 0)
    col = jax.lax.broadcasted_iota(jnp.int32, (n, n), 1)
    mask = (adj > 0) | (row == col)                                     # in-kernel self-loop mask
    e = jnp.where(mask, e, -1e30)
    e = e - jnp.max(e, axis=-1, keepdims=True)
    p = jnp.exp(e)                          # masked entries underflow to 0
    inv_den = pl.reciprocal(jnp.sum(p, axis=-1, keepdims=True), approx=True)
    alpha = p * inv_den
    hg = jnp.dot(alpha.astype(bf16), hg.astype(bf16),
                 preferred_element_type=f32) + gat_bias

    # ---- global_add_pool ----
    z = jnp.dot(pool_ref[...], hg.astype(bf16), preferred_element_type=f32)  # (8, D)

    # ---- fc1 + relu (split into two lane-dense 128-wide halves) ----
    z16 = z.astype(bf16)
    za = jnp.maximum(jnp.dot(z16, fc1_wa, preferred_element_type=f32) + fc1_ba, 0.0)
    zb = jnp.maximum(jnp.dot(z16, fc1_wb, preferred_element_type=f32) + fc1_bb, 0.0)

    # ---- 3 MLP heads fused: packed hw1 (row-split) + block-diagonal hw2 ----
    hk = (jnp.dot(za.astype(bf16), hw1_a, preferred_element_type=f32)
          + jnp.dot(zb.astype(bf16), hw1_b, preferred_element_type=f32) + hb1)
    hk = jnp.maximum(hk, 0.0)
    out_ref[...] = jnp.dot(hk.astype(bf16), hw2, preferred_element_type=f32) + hb2


def init_params(key, n_features, dim=95, dim5=12):
    def lin(key, fan_in, shape):
        bound = 1.0 / jnp.sqrt(float(fan_in))
        return jax.random.uniform(key, shape, jnp.float32, -bound, bound)

    ks = jax.random.split(key, 20)
    p = {}
    # GIN nn1 = Linear(F, D) -> ReLU -> Linear(D, D)
    p["w1a"] = lin(ks[0], n_features, (n_features, dim))
    p["b1a"] = lin(ks[1], n_features, (1, dim))
    p["w1b"] = lin(ks[2], dim, (dim, dim))
    p["b1b"] = lin(ks[3], dim, (1, dim))
    # BatchNorm1d(dim)
    p["bn_g"] = jnp.ones((1, dim), jnp.float32)
    p["bn_b"] = jnp.zeros((1, dim), jnp.float32)
    # GATConv(dim, dim, heads=1)
    p["gat_w"] = lin(ks[4], dim, (dim, dim))
    p["gat_asrc"] = lin(ks[5], dim, (1, dim))
    p["gat_adst"] = lin(ks[6], dim, (1, dim))
    p["gat_bias"] = jnp.zeros((1, dim), jnp.float32)
    # fc1 = Linear(dim, 2*dim)
    p["fc1_w"] = lin(ks[7], dim, (dim, 2 * dim))
    p["fc1_b"] = lin(ks[8], dim, (1, 2 * dim))
    # 3 heads: Linear(2*dim, dim5) -> Linear(dim5, 1), stacked on leading axis
    p["hw1"] = lin(ks[9], 2 * dim, (3, 2 * dim, dim5))
    p["hb1"] = lin(ks[10], 2 * dim, (3, 1, dim5))
    p["hw2"] = lin(ks[11], dim5, (3, dim5, 1))
    p["hb2"] = lin(ks[12], dim5, (3, 1, 1))
    return p


def pack_params(p):
    """Pack all weights into one bf16 (1024,128) slab + one f32 (16,128) slab."""
    dim2 = p["fc1_w"].shape[1]
    dim5 = p["hw1"].shape[2]

    def pad2(a, r, c):
        return jnp.pad(a, ((0, r - a.shape[0]), (0, c - a.shape[1])))

    # Fuse the 3 heads: hw1 packed column-wise, hw2 block-diagonal, biases packed.
    hw1 = jnp.zeros((D2_PAD, HID_PAD), jnp.float32)
    hb1 = jnp.zeros((1, HID_PAD), jnp.float32)
    hw2 = jnp.zeros((HID_PAD, OUT_PAD), jnp.float32)
    hb2 = jnp.zeros((1, OUT_PAD), jnp.float32)
    for k in range(3):
        hw1 = hw1.at[:dim2, k * dim5:(k + 1) * dim5].set(p["hw1"][k])
        hb1 = hb1.at[:, k * dim5:(k + 1) * dim5].set(p["hb1"][k])
        hw2 = hw2.at[k * dim5:(k + 1) * dim5, k:k + 1].set(p["hw2"][k])
        hb2 = hb2.at[:, k:k + 1].set(p["hb2"][k])

    fc1_w = pad2(p["fc1_w"], D_PAD, D2_PAD)

    w_slab = jnp.concatenate([
        pad2(p["w1a"], F_PAD, D_PAD),        # rows    0:128
        pad2(p["w1b"], D_PAD, D_PAD),        # rows  128:256
        pad2(p["gat_w"], D_PAD, D_PAD),      # rows  256:384
        fc1_w[:, 0:D_PAD],                   # rows  384:512
        fc1_w[:, D_PAD:D2_PAD],              # rows  512:640
        hw1[0:D_PAD, :],                     # rows  640:768
        hw1[D_PAD:D2_PAD, :],                # rows  768:896
        hw2,                                 # rows  896:1024
    ], axis=0).astype(jnp.bfloat16)

    fc1_b = pad2(p["fc1_b"], 1, D2_PAD)
    vec_rows = [
        pad2(p["b1a"], 1, D_PAD),            # 0
        pad2(p["b1b"], 1, D_PAD),            # 1
        pad2(p["bn_g"], 1, D_PAD),           # 2
        pad2(p["bn_b"], 1, D_PAD),           # 3
        pad2(p["gat_asrc"], 1, D_PAD),       # 4
        pad2(p["gat_adst"], 1, D_PAD),       # 5
        pad2(p["gat_bias"], 1, D_PAD),       # 6
        fc1_b[:, 0:D_PAD],                   # 7
        fc1_b[:, D_PAD:D2_PAD],              # 8
        hb1,                                 # 9
        hb2,                                 # 10
    ]
    pad_rows = jnp.zeros((VSLAB_ROWS - len(vec_rows), D_PAD), jnp.float32)
    v_slab = jnp.concatenate(vec_rows + [pad_rows], axis=0)
    return w_slab, v_slab


def gin_att_net(x, edge_index, batch, params, num_graphs):
    N, nf = x.shape
    assert nf <= F_PAD and params["w1b"].shape[0] <= D_PAD

    g_pad = _round_up(max(num_graphs, 1), G_SUB)
    w_slab, v_slab = pack_params(params)

    # Dense message-passing operators (glue, outside the kernel). bf16 is exact
    # for the 0/1 adjacency / pooling values used here.
    src = edge_index[0]
    dst = edge_index[1]
    adj_gin = jnp.zeros((N, N), jnp.float32).at[dst, src].add(1.0)      # j -> i sum
    pool = (batch[None, :] == jnp.arange(g_pad)[:, None]).astype(jnp.float32)

    x_pad = jnp.pad(x.astype(jnp.float32), ((0, 0), (0, F_PAD - nf)))

    vmem = pl.BlockSpec(memory_space=pltpu.MemorySpace.VMEM)
    slab = pl.pallas_call(
        gin_att_kernel,
        out_shape=jax.ShapeDtypeStruct((g_pad, OUT_PAD), jnp.float32),
        in_specs=[vmem] * 5,
        out_specs=vmem,
    )(x_pad, adj_gin.astype(jnp.bfloat16), pool.astype(jnp.bfloat16),
      w_slab, v_slab)

    out1 = jax.nn.sigmoid(slab[:num_graphs, 0:1])
    out2 = slab[:num_graphs, 1:2]
    out3 = slab[:num_graphs, 2:3]
    return [out1, out2, out3]


if __name__ == "__main__":
    n_features = 8
    dim = 95
    nodes_per_graph = 16
    num_graphs = 4
    N = nodes_per_graph * num_graphs

    key = jax.random.PRNGKey(0)
    k_x, k_p = jax.random.split(key)

    # Deterministic small graph batch: ring graphs (bidirected edges).
    edges = []
    for g in range(num_graphs):
        base = g * nodes_per_graph
        for i in range(nodes_per_graph):
            j = (i + 1) % nodes_per_graph
            edges.append((base + i, base + j))
            edges.append((base + j, base + i))
    edge_index = jnp.array(edges, dtype=jnp.int32).T       # (2, E)
    batch = jnp.repeat(jnp.arange(num_graphs, dtype=jnp.int32), nodes_per_graph)

    x = jax.random.normal(k_x, (N, n_features), jnp.float32)
    params = init_params(k_p, n_features, dim=dim)

    outs = gin_att_net(x, edge_index, batch, params, num_graphs)
    outs = jax.block_until_ready(outs)

    assert all(o.shape == (num_graphs, 1) for o in outs)
    assert all(jnp.all(jnp.isfinite(o)) for o in outs)
    assert jnp.all((outs[0] >= 0.0) & (outs[0] <= 1.0))   # sigmoid head
    print("KERNEL_OK")
</pallas_src>

<mosaic_0001>
module attributes {stable_mosaic.version = 11 : i64} {
  func.func @gin_att_kernel(%arg0: memref<64x128xf32, #tpu.memory_space<vmem>>, %arg1: memref<64x64xbf16, #tpu.memory_space<vmem>>, %arg2: memref<8x64xbf16, #tpu.memory_space<vmem>>, %arg3: memref<1024x128xbf16, #tpu.memory_space<vmem>>, %arg4: memref<16x128xf32, #tpu.memory_space<vmem>>, %arg5: memref<8x128xf32, #tpu.memory_space<vmem>>) attributes {dimension_semantics = [], scalar_prefetch = 0 : i64, scratch_operands = 0 : i64, tpu.core_type = #tpu.core_type<tc>} {
    %c0 = arith.constant 0 : index
    %c0_0 = arith.constant 0 : index
    %0 = vector.load %arg3[%c0, %c0_0] : memref<1024x128xbf16, #tpu.memory_space<vmem>>, vector<128x128xbf16>
    %c128 = arith.constant 128 : index
    %c0_1 = arith.constant 0 : index
    %1 = vector.load %arg3[%c128, %c0_1] : memref<1024x128xbf16, #tpu.memory_space<vmem>>, vector<128x128xbf16>
    %c256 = arith.constant 256 : index
    %c0_2 = arith.constant 0 : index
    %2 = vector.load %arg3[%c256, %c0_2] : memref<1024x128xbf16, #tpu.memory_space<vmem>>, vector<128x128xbf16>
    %c384 = arith.constant 384 : index
    %c0_3 = arith.constant 0 : index
    %3 = vector.load %arg3[%c384, %c0_3] : memref<1024x128xbf16, #tpu.memory_space<vmem>>, vector<128x128xbf16>
    %c512 = arith.constant 512 : index
    %c0_4 = arith.constant 0 : index
    %4 = vector.load %arg3[%c512, %c0_4] : memref<1024x128xbf16, #tpu.memory_space<vmem>>, vector<128x128xbf16>
    %c640 = arith.constant 640 : index
    %c0_5 = arith.constant 0 : index
    %5 = vector.load %arg3[%c640, %c0_5] : memref<1024x128xbf16, #tpu.memory_space<vmem>>, vector<128x128xbf16>
    %c768 = arith.constant 768 : index
    %c0_6 = arith.constant 0 : index
    %6 = vector.load %arg3[%c768, %c0_6] : memref<1024x128xbf16, #tpu.memory_space<vmem>>, vector<128x128xbf16>
    %c896 = arith.constant 896 : index
    %c0_7 = arith.constant 0 : index
    %7 = vector.load %arg3[%c896, %c0_7] : memref<1024x128xbf16, #tpu.memory_space<vmem>>, vector<128x128xbf16>
    %c0_8 = arith.constant 0 : index
    %c0_9 = arith.constant 0 : index
    %8 = vector.load %arg4[%c0_8, %c0_9] : memref<16x128xf32, #tpu.memory_space<vmem>>, vector<16x128xf32>
    %9 = vector.extract_strided_slice %8 {offsets = [0, 0], sizes = [1, 128], strides = [1, 1]} : vector<16x128xf32> to vector<1x128xf32>
    %10 = vector.extract_strided_slice %8 {offsets = [1, 0], sizes = [1, 128], strides = [1, 1]} : vector<16x128xf32> to vector<1x128xf32>
    %11 = vector.extract_strided_slice %8 {offsets = [2, 0], sizes = [1, 128], strides = [1, 1]} : vector<16x128xf32> to vector<1x128xf32>
    %12 = vector.extract_strided_slice %8 {offsets = [3, 0], sizes = [1, 128], strides = [1, 1]} : vector<16x128xf32> to vector<1x128xf32>
    %13 = vector.extract_strided_slice %8 {offsets = [4, 0], sizes = [1, 128], strides = [1, 1]} : vector<16x128xf32> to vector<1x128xf32>
    %14 = vector.extract_strided_slice %8 {offsets = [5, 0], sizes = [1, 128], strides = [1, 1]} : vector<16x128xf32> to vector<1x128xf32>
    %15 = vector.extract_strided_slice %8 {offsets = [6, 0], sizes = [1, 128], strides = [1, 1]} : vector<16x128xf32> to vector<1x128xf32>
    %16 = vector.extract_strided_slice %8 {offsets = [7, 0], sizes = [1, 128], strides = [1, 1]} : vector<16x128xf32> to vector<1x128xf32>
    %17 = vector.extract_strided_slice %8 {offsets = [8, 0], sizes = [1, 128], strides = [1, 1]} : vector<16x128xf32> to vector<1x128xf32>
    %18 = vector.extract_strided_slice %8 {offsets = [9, 0], sizes = [1, 128], strides = [1, 1]} : vector<16x128xf32> to vector<1x128xf32>
    %19 = vector.extract_strided_slice %8 {offsets = [10, 0], sizes = [1, 128], strides = [1, 1]} : vector<16x128xf32> to vector<1x128xf32>
    %c0_10 = arith.constant 0 : index
    %c0_11 = arith.constant 0 : index
    %20 = vector.load %arg0[%c0_10, %c0_11] : memref<64x128xf32, #tpu.memory_space<vmem>>, vector<64x128xf32>
    %c0_12 = arith.constant 0 : index
    %c0_13 = arith.constant 0 : index
    %21 = vector.load %arg1[%c0_12, %c0_13] : memref<64x64xbf16, #tpu.memory_space<vmem>>, vector<64x64xbf16>
    %22 = arith.truncf %20 : vector<64x128xf32> to vector<64x128xbf16>
    %cst = arith.constant dense<0.000000e+00> : vector<64x128xf32>
    %23 = tpu.matmul %21, %22, %cst {dimension_numbers = #tpu.dot_dimension_numbers<[1], [0], [0], [1], [0, 0, 1, 1], [], []>} : vector<64x64xbf16>, vector<64x128xbf16>, vector<64x128xf32> -> vector<64x128xf32>
    %24 = arith.addf %20, %23 : vector<64x128xf32>
    %25 = arith.truncf %24 : vector<64x128xf32> to vector<64x128xbf16>
    %cst_14 = arith.constant dense<0.000000e+00> : vector<64x128xf32>
    %26 = tpu.matmul %25, %0, %cst_14 {dimension_numbers = #tpu.dot_dimension_numbers<[1], [0], [0], [1], [0, 0, 1, 1], [], []>} : vector<64x128xbf16>, vector<128x128xbf16>, vector<64x128xf32> -> vector<64x128xf32>
    %27 = vector.broadcast %9 : vector<1x128xf32> to vector<64x128xf32>
    %28 = arith.addf %26, %27 : vector<64x128xf32>
    %cst_15 = arith.constant 0.000000e+00 : f32
    %29 = vector.broadcast %cst_15 : f32 to vector<64x128xf32>
    %30 = arith.maximumf %28, %29 : vector<64x128xf32>
    %31 = arith.truncf %30 : vector<64x128xf32> to vector<64x128xbf16>
    %cst_16 = arith.constant dense<0.000000e+00> : vector<64x128xf32>
    %32 = tpu.matmul %31, %1, %cst_16 {dimension_numbers = #tpu.dot_dimension_numbers<[1], [0], [0], [1], [0, 0, 1, 1], [], []>} : vector<64x128xbf16>, vector<128x128xbf16>, vector<64x128xf32> -> vector<64x128xf32>
    %33 = vector.broadcast %10 : vector<1x128xf32> to vector<64x128xf32>
    %34 = arith.addf %32, %33 : vector<64x128xf32>
    %cst_17 = arith.constant 0.000000e+00 : f32
    %35 = vector.broadcast %cst_17 : f32 to vector<64x128xf32>
    %36 = arith.maximumf %34, %35 : vector<64x128xf32>
    %cst_18 = arith.constant dense<0.000000e+00> : vector<128xf32>
    %37 = vector.multi_reduction <add>, %36, %cst_18 [0] : vector<64x128xf32> to vector<128xf32>
    %38 = vector.shape_cast %37 : vector<128xf32> to vector<1x128xf32>
    %cst_19 = arith.constant 6.400000e+01 : f32
    %39 = vector.broadcast %cst_19 : f32 to vector<1x128xf32>
    %40 = arith.divf %38, %39 : vector<1x128xf32>
    %41 = arith.mulf %36, %36 : vector<64x128xf32>
    %cst_20 = arith.constant dense<0.000000e+00> : vector<128xf32>
    %42 = vector.multi_reduction <add>, %41, %cst_20 [0] : vector<64x128xf32> to vector<128xf32>
    %43 = vector.shape_cast %42 : vector<128xf32> to vector<1x128xf32>
    %cst_21 = arith.constant 6.400000e+01 : f32
    %44 = vector.broadcast %cst_21 : f32 to vector<1x128xf32>
    %45 = arith.divf %43, %44 : vector<1x128xf32>
    %46 = arith.mulf %40, %40 : vector<1x128xf32>
    %47 = arith.subf %45, %46 : vector<1x128xf32>
    %cst_22 = arith.constant 0.000000e+00 : f32
    %48 = vector.broadcast %cst_22 : f32 to vector<1x128xf32>
    %49 = arith.maximumf %47, %48 : vector<1x128xf32>
    %cst_23 = arith.constant 9.99999974E-6 : f32
    %50 = vector.broadcast %cst_23 : f32 to vector<1x128xf32>
    %51 = arith.addf %49, %50 : vector<1x128xf32>
    %52 = math.rsqrt %51 : vector<1x128xf32>
    %53 = arith.mulf %11, %52 : vector<1x128xf32>
    %54 = arith.mulf %40, %53 : vector<1x128xf32>
    %55 = arith.subf %12, %54 : vector<1x128xf32>
    %56 = vector.broadcast %53 : vector<1x128xf32> to vector<64x128xf32>
    %57 = arith.mulf %36, %56 : vector<64x128xf32>
    %58 = vector.broadcast %55 : vector<1x128xf32> to vector<64x128xf32>
    %59 = arith.addf %57, %58 : vector<64x128xf32>
    %60 = arith.truncf %59 : vector<64x128xf32> to vector<64x128xbf16>
    %cst_24 = arith.constant dense<0.000000e+00> : vector<64x128xf32>
    %61 = tpu.matmul %60, %2, %cst_24 {dimension_numbers = #tpu.dot_dimension_numbers<[1], [0], [0], [1], [0, 0, 1, 1], [], []>} : vector<64x128xbf16>, vector<128x128xbf16>, vector<64x128xf32> -> vector<64x128xf32>
    %cst_25 = arith.constant dense<0.000000e+00> : vector<64x1xf32>
    %62 = tpu.matmul %61, %14, %cst_25 {dimension_numbers = #tpu.dot_dimension_numbers<[1], [1], [0], [0], [0, 0, 1, 0], [], []>} : vector<64x128xf32>, vector<1x128xf32>, vector<64x1xf32> -> vector<64x1xf32>
    %cst_26 = arith.constant dense<0.000000e+00> : vector<1x64xf32>
    %63 = tpu.matmul %13, %61, %cst_26 {dimension_numbers = #tpu.dot_dimension_numbers<[1], [1], [0], [0], [0, 0, 1, 0], [], []>} : vector<1x128xf32>, vector<64x128xf32>, vector<1x64xf32> -> vector<1x64xf32>
    %64 = vector.broadcast %62 : vector<64x1xf32> to vector<64x64xf32>
    %65 = vector.broadcast %63 : vector<1x64xf32> to vector<64x64xf32>
    %66 = arith.addf %64, %65 : vector<64x64xf32>
    %cst_27 = arith.constant 0.000000e+00 : f32
    %67 = vector.broadcast %cst_27 : f32 to vector<64x64xf32>
    %68 = arith.cmpf ogt, %66, %67 : vector<64x64xf32>
    %cst_28 = arith.constant 2.000000e-01 : f32
    %69 = vector.broadcast %cst_28 : f32 to vector<64x64xf32>
    %70 = arith.mulf %69, %66 : vector<64x64xf32>
    %71 = arith.select %68, %66, %70 : vector<64x64xi1>, vector<64x64xf32>
    %72 = tpu.iota {dimensions = array<i32: 0>} : vector<64x64xi32>
    %73 = tpu.iota {dimensions = array<i32: 1>} : vector<64x64xi32>
    %cst_29 = arith.constant 0.000000e+00 : bf16
    %74 = vector.broadcast %cst_29 : bf16 to vector<64x64xbf16>
    %75 = arith.cmpf ogt, %21, %74 : vector<64x64xbf16>
    %76 = arith.cmpi eq, %72, %73 : vector<64x64xi32>
    %77 = arith.ori %75, %76 : vector<64x64xi1>
    %cst_30 = arith.constant -1.000000e+30 : f32
    %78 = vector.broadcast %cst_30 : f32 to vector<64x64xf32>
    %79 = arith.select %77, %71, %78 : vector<64x64xi1>, vector<64x64xf32>
    %cst_31 = arith.constant dense<0xFF800000> : vector<64xf32>
    %80 = vector.multi_reduction <maximumf>, %79, %cst_31 [1] : vector<64x64xf32> to vector<64xf32>
    %81 = vector.shape_cast %80 : vector<64xf32> to vector<64x1xf32>
    %82 = vector.broadcast %81 : vector<64x1xf32> to vector<64x64xf32>
    %83 = arith.subf %79, %82 : vector<64x64xf32>
    %84 = math.exp %83 : vector<64x64xf32>
    %cst_32 = arith.constant dense<0.000000e+00> : vector<64xf32>
    %85 = vector.multi_reduction <add>, %84, %cst_32 [1] : vector<64x64xf32> to vector<64xf32>
    %86 = vector.shape_cast %85 : vector<64xf32> to vector<64x1xf32>
    %87 = tpu.reciprocal %86 {approx = true} : vector<64x1xf32> -> vector<64x1xf32>
    %88 = vector.broadcast %87 : vector<64x1xf32> to vector<64x64xf32>
    %89 = arith.mulf %84, %88 : vector<64x64xf32>
    %90 = arith.truncf %89 : vector<64x64xf32> to vector<64x64xbf16>
    %91 = arith.truncf %61 : vector<64x128xf32> to vector<64x128xbf16>
    %cst_33 = arith.constant dense<0.000000e+00> : vector<64x128xf32>
    %92 = tpu.matmul %90, %91, %cst_33 {dimension_numbers = #tpu.dot_dimension_numbers<[1], [0], [0], [1], [0, 0, 1, 1], [], []>} : vector<64x64xbf16>, vector<64x128xbf16>, vector<64x128xf32> -> vector<64x128xf32>
    %93 = vector.broadcast %15 : vector<1x128xf32> to vector<64x128xf32>
    %94 = arith.addf %92, %93 : vector<64x128xf32>
    %c0_34 = arith.constant 0 : index
    %c0_35 = arith.constant 0 : index
    %95 = vector.load %arg2[%c0_34, %c0_35] : memref<8x64xbf16, #tpu.memory_space<vmem>>, vector<8x64xbf16>
    %96 = arith.truncf %94 : vector<64x128xf32> to vector<64x128xbf16>
    %cst_36 = arith.constant dense<0.000000e+00> : vector<8x128xf32>
    %97 = tpu.matmul %95, %96, %cst_36 {dimension_numbers = #tpu.dot_dimension_numbers<[1], [0], [0], [1], [0, 0, 1, 1], [], []>} : vector<8x64xbf16>, vector<64x128xbf16>, vector<8x128xf32> -> vector<8x128xf32>
    %98 = arith.truncf %97 : vector<8x128xf32> to vector<8x128xbf16>
    %cst_37 = arith.constant dense<0.000000e+00> : vector<8x128xf32>
    %99 = tpu.matmul %98, %3, %cst_37 {dimension_numbers = #tpu.dot_dimension_numbers<[1], [0], [0], [1], [0, 0, 1, 1], [], []>} : vector<8x128xbf16>, vector<128x128xbf16>, vector<8x128xf32> -> vector<8x128xf32>
    %100 = vector.broadcast %16 : vector<1x128xf32> to vector<8x128xf32>
    %101 = arith.addf %99, %100 : vector<8x128xf32>
    %cst_38 = arith.constant 0.000000e+00 : f32
    %102 = vector.broadcast %cst_38 : f32 to vector<8x128xf32>
    %103 = arith.maximumf %101, %102 : vector<8x128xf32>
    %cst_39 = arith.constant dense<0.000000e+00> : vector<8x128xf32>
    %104 = tpu.matmul %98, %4, %cst_39 {dimension_numbers = #tpu.dot_dimension_numbers<[1], [0], [0], [1], [0, 0, 1, 1], [], []>} : vector<8x128xbf16>, vector<128x128xbf16>, vector<8x128xf32> -> vector<8x128xf32>
    %105 = vector.broadcast %17 : vector<1x128xf32> to vector<8x128xf32>
    %106 = arith.addf %104, %105 : vector<8x128xf32>
    %cst_40 = arith.constant 0.000000e+00 : f32
    %107 = vector.broadcast %cst_40 : f32 to vector<8x128xf32>
    %108 = arith.maximumf %106, %107 : vector<8x128xf32>
    %109 = arith.truncf %103 : vector<8x128xf32> to vector<8x128xbf16>
    %cst_41 = arith.constant dense<0.000000e+00> : vector<8x128xf32>
    %110 = tpu.matmul %109, %5, %cst_41 {dimension_numbers = #tpu.dot_dimension_numbers<[1], [0], [0], [1], [0, 0, 1, 1], [], []>} : vector<8x128xbf16>, vector<128x128xbf16>, vector<8x128xf32> -> vector<8x128xf32>
    %111 = arith.truncf %108 : vector<8x128xf32> to vector<8x128xbf16>
    %cst_42 = arith.constant dense<0.000000e+00> : vector<8x128xf32>
    %112 = tpu.matmul %111, %6, %cst_42 {dimension_numbers = #tpu.dot_dimension_numbers<[1], [0], [0], [1], [0, 0, 1, 1], [], []>} : vector<8x128xbf16>, vector<128x128xbf16>, vector<8x128xf32> -> vector<8x128xf32>
    %113 = arith.addf %110, %112 : vector<8x128xf32>
    %114 = vector.broadcast %18 : vector<1x128xf32> to vector<8x128xf32>
    %115 = arith.addf %113, %114 : vector<8x128xf32>
    %cst_43 = arith.constant 0.000000e+00 : f32
    %116 = vector.broadcast %cst_43 : f32 to vector<8x128xf32>
    %117 = arith.maximumf %115, %116 : vector<8x128xf32>
    %118 = arith.truncf %117 : vector<8x128xf32> to vector<8x128xbf16>
    %cst_44 = arith.constant dense<0.000000e+00> : vector<8x128xf32>
    %119 = tpu.matmul %118, %7, %cst_44 {dimension_numbers = #tpu.dot_dimension_numbers<[1], [0], [0], [1], [0, 0, 1, 1], [], []>} : vector<8x128xbf16>, vector<128x128xbf16>, vector<8x128xf32> -> vector<8x128xf32>
    %120 = vector.broadcast %19 : vector<1x128xf32> to vector<8x128xf32>
    %121 = arith.addf %119, %120 : vector<8x128xf32>
    %c0_45 = arith.constant 0 : index
    %c0_46 = arith.constant 0 : index
    %122 = vector.load %arg5[%c0_45, %c0_46] : memref<8x128xf32, #tpu.memory_space<vmem>>, vector<8x128xf32>
    tpu.vector_store %arg5[%c0_45, %c0_46], %121 {strides = array<i32>} : memref<8x128xf32, #tpu.memory_space<vmem>>, vector<8x128xf32>,
    return
  }
}

</mosaic_0001>

<llo_original>
// kernel: tpu_custom_call.1
$region0: #{tpu_custom_call.1}
  #allocation0 [shape = 'u32[]', space=smem, size = 0x4, offset = 0x4, fixed_abs, tag = 'smem constant byte address 0x4 - core index']
  #allocation1 [shape = 'u32[72,128]{1,0:T(1,128)}', space=vmem, size = 0x9000, scoped, tag = 'internal scratch']
  %s0 = inlined_call_operand.hbm [shape: f32[64,128], index: 0, kind: input, shape index: {}]
  %s1 = inlined_call_operand.hbm [shape: bf16[64,64], index: 1, kind: input, shape index: {}]
  %s2 = inlined_call_operand.hbm [shape: bf16[8,64], index: 2, kind: input, shape index: {}]
  %s3 = inlined_call_operand.hbm [shape: bf16[1024,128], index: 3, kind: input, shape index: {}]
  %s4 = inlined_call_operand.hbm [shape: f32[16,128], index: 4, kind: input, shape index: {}]
  %s5 = inlined_call_operand.hbm [shape: f32[8,128], index: 5, kind: output, shape index: {}]
  %s6 = sld [smem:[#allocation0]]
  $region50: #{tpu_custom_call.1} parent=0
    _
  %s8 = ssub.s32 1, %s6
  %s9 = scalar_select 0, %s8, %s6
  $region1: #{tpu_custom_call.1} parent=0
    #allocation2 [shape = 'u8[32768]{0}', space=vmem, size = 0x8000, scoped, tag = 'input window, operand 0, single buffered']
    #allocation3 [shape = 's32[1]{0}', space=sflag, size = 0x4, scoped, tag = 'scoped memory for tpu_custom_call.1']
    #allocation4 [shape = 's32[1]{0}', space=sflag, size = 0x4, scoped, tag = 'scoped memory for tpu_custom_call.1']
    #allocation5 [shape = 'u8[16384]{0}', space=vmem, size = 0x4000, scoped, tag = 'input window, operand 1, single buffered']
    #allocation6 [shape = 's32[1]{0}', space=sflag, size = 0x4, scoped, tag = 'scoped memory for tpu_custom_call.1']
    #allocation7 [shape = 'u8[2048]{0}', space=vmem, size = 0x800, scoped, tag = 'input window, operand 2, single buffered']
    #allocation8 [shape = 'u8[262144]{0}', space=vmem, size = 0x40000, scoped, tag = 'input window, operand 3, single buffered']
    #allocation9 [shape = 's32[1]{0}', space=sflag, size = 0x4, scoped, tag = 'scoped memory for tpu_custom_call.1']
    #allocation10 [shape = 'u8[8192]{0}', space=vmem, size = 0x2000, scoped, tag = 'input window, operand 4, single buffered']
    #allocation11 [shape = 'u8[4096]{0}', space=vmem, size = 0x1000, scoped, tag = 'output window, operand 0, single buffered']
    %10 = vsyncpa [#allocation3], 0
    %11 = vsyncpa [#allocation6], 0
    %12 = vsyncpa [#allocation9], 0
    %13 = vsyncpa [#allocation4], 0
    // Predicated region
    $region2: #{tpu_custom_call.1} parent=1 // pred_check
      _
    $region3: #{tpu_custom_call.1} parent=1 // pred_check_branch
      %15 = sbr.rel (0) target = $region5
    $region4: #{tpu_custom_call.1} parent=1 // pred_region
      %17 = vsyncadd [#allocation3], 0
      %s18 = sshll.u32 %s0, 4
      %s19 = int_to_ptr.hbm [resolvable:$true] %s18
      %s20 = sshll.u32 [#allocation2], 4
      %s21 = int_to_ptr.vmem [resolvable:$true] %s20
      %26 = dma.hbm_to_vmem [thread:$0]  %s19, 1024, %s21, [#allocation3], 128, 128, 8
    $region5: #{tpu_custom_call.1} parent=1 // pred_fallthru
      _
    // Predicated region
    $region6: #{tpu_custom_call.1} parent=1 // pred_check
      _
    $region7: #{tpu_custom_call.1} parent=1 // pred_check_branch
      %28 = sbr.rel (0) target = $region9
    $region8: #{tpu_custom_call.1} parent=1 // pred_region
      %30 = vsyncadd [#allocation6], 0
      %s31 = sshll.u32 %s1, 4
      %s32 = int_to_ptr.hbm [resolvable:$true] %s31
      %s33 = sshll.u32 [#allocation5], 4
      %s34 = int_to_ptr.vmem [resolvable:$true] %s33
      %39 = dma.hbm_to_vmem [thread:$0]  %s32, 512, %s34, [#allocation6], 64, 64, 4
    $region9: #{tpu_custom_call.1} parent=1 // pred_fallthru
      _
    // Predicated region
    $region10: #{tpu_custom_call.1} parent=1 // pred_check
      _
    $region11: #{tpu_custom_call.1} parent=1 // pred_check_branch
      %41 = sbr.rel (0) target = $region13
    $region12: #{tpu_custom_call.1} parent=1 // pred_region
      %43 = vsyncadd [#allocation6], 0
      %s45 = sshll.u32 %s2, 4
      %s46 = int_to_ptr.hbm [resolvable:$true] %s45
      %s47 = sshll.u32 [#allocation7], 4
      %s48 = int_to_ptr.vmem [resolvable:$true] %s47
      %50 = dma.hbm_to_vmem [thread:$0]  %s46, 64, %s48, [#allocation6]
    $region13: #{tpu_custom_call.1} parent=1 // pred_fallthru
      _
    // Predicated region
    $region14: #{tpu_custom_call.1} parent=1 // pred_check
      _
    $region15: #{tpu_custom_call.1} parent=1 // pred_check_branch
      %52 = sbr.rel (0) target = $region17
    $region16: #{tpu_custom_call.1} parent=1 // pred_region
      %54 = vsyncadd [#allocation9], 0
      %s55 = sshll.u32 %s3, 4
      %s56 = int_to_ptr.hbm [resolvable:$true] %s55
      %s57 = sshll.u32 [#allocation8], 4
      %s58 = int_to_ptr.vmem [resolvable:$true] %s57
      %63 = dma.hbm_to_vmem [thread:$0]  %s56, 8192, %s58, [#allocation9], 64, 64, 4
    $region17: #{tpu_custom_call.1} parent=1 // pred_fallthru
      _
    // Predicated region
    $region18: #{tpu_custom_call.1} parent=1 // pred_check
      _
    $region19: #{tpu_custom_call.1} parent=1 // pred_check_branch
      %65 = sbr.rel (0) target = $region21
    $region20: #{tpu_custom_call.1} parent=1 // pred_region
      %67 = vsyncadd [#allocation9], 0
      %s68 = sshll.u32 %s4, 4
      %s69 = int_to_ptr.hbm [resolvable:$true] %s68
      %s70 = sshll.u32 [#allocation10], 4
      %s71 = int_to_ptr.vmem [resolvable:$true] %s70
      %76 = dma.hbm_to_vmem [thread:$0]  %s69, 256, %s71, [#allocation9], 128, 128, 8
    $region21: #{tpu_custom_call.1} parent=1 // pred_fallthru
      _
    // Predicated region
    $region22: #{tpu_custom_call.1} parent=1 // pred_check
      _
    $region23: #{tpu_custom_call.1} parent=1 // pred_check_branch
      %78 = sbr.rel (0) target = $region25
    $region24: #{tpu_custom_call.1} parent=1 // pred_region
      %80 = dma.done [#allocation3], 1024
    $region25: #{tpu_custom_call.1} parent=1 // pred_fallthru
      _
    // Predicated region
    $region26: #{tpu_custom_call.1} parent=1 // pred_check
      _
    $region27: #{tpu_custom_call.1} parent=1 // pred_check_branch
      %82 = sbr.rel (0) target = $region29
    $region28: #{tpu_custom_call.1} parent=1 // pred_region
      %84 = dma.done [#allocation6], 512
    $region29: #{tpu_custom_call.1} parent=1 // pred_fallthru
      _
    // Predicated region
    $region30: #{tpu_custom_call.1} parent=1 // pred_check
      _
    $region31: #{tpu_custom_call.1} parent=1 // pred_check_branch
      %86 = sbr.rel (0) target = $region33
    $region32: #{tpu_custom_call.1} parent=1 // pred_region
      %88 = dma.done [#allocation6], 64
    $region33: #{tpu_custom_call.1} parent=1 // pred_fallthru
      _
    // Predicated region
    $region34: #{tpu_custom_call.1} parent=1 // pred_check
      _
    $region35: #{tpu_custom_call.1} parent=1 // pred_check_branch
      %90 = sbr.rel (0) target = $region37
    $region36: #{tpu_custom_call.1} parent=1 // pred_region
      %92 = dma.done [#allocation9], 8192
    $region37: #{tpu_custom_call.1} parent=1 // pred_fallthru
      _
    // Predicated region
    $region38: #{tpu_custom_call.1} parent=1 // pred_check
      _
    $region39: #{tpu_custom_call.1} parent=1 // pred_check_branch
      %94 = sbr.rel (0) target = $region41
    $region40: #{tpu_custom_call.1} parent=1 // pred_region
      %96 = dma.done [#allocation9], 256
    $region41: #{tpu_custom_call.1} parent=1 // pred_fallthru
      _
    %v98 = vld [vmem:[#allocation8] sm:$0xf]
    %v99 = vld [vmem:[#allocation8 + $0x4] sm:$0xf]
    %v100 = vld [vmem:[#allocation8 + $0x8] sm:$0xf]
    %v101 = vld [vmem:[#allocation8 + $0xc] sm:$0xf]
    %v102 = vld [vmem:[#allocation8 + $0x10] sm:$0xf]
    %v103 = vld [vmem:[#allocation8 + $0x14] sm:$0xf]
    %v104 = vld [vmem:[#allocation8 + $0x18] sm:$0xf]
    %v105 = vld [vmem:[#allocation8 + $0x1c] sm:$0xf]
    %v106 = vld [vmem:[#allocation8 + $0x20] sm:$0xf]
    %v107 = vld [vmem:[#allocation8 + $0x24] sm:$0xf]
    %v108 = vld [vmem:[#allocation8 + $0x28] sm:$0xf]
    %v109 = vld [vmem:[#allocation8 + $0x2c] sm:$0xf]
    %v110 = vld [vmem:[#allocation8 + $0x30] sm:$0xf]
    %v111 = vld [vmem:[#allocation8 + $0x34] sm:$0xf]
    %v112 = vld [vmem:[#allocation8 + $0x38] sm:$0xf]
    %v113 = vld [vmem:[#allocation8 + $0x3c] sm:$0xf]
    %v114 = vld [vmem:[#allocation8 + $0x40] sm:$0xf]
    %v115 = vld [vmem:[#allocation8 + $0x44] sm:$0xf]
    %v116 = vld [vmem:[#allocation8 + $0x48] sm:$0xf]
    %v117 = vld [vmem:[#allocation8 + $0x4c] sm:$0xf]
    %v118 = vld [vmem:[#allocation8 + $0x50] sm:$0xf]
    %v119 = vld [vmem:[#allocation8 + $0x54] sm:$0xf]
    %v120 = vld [vmem:[#allocation8 + $0x58] sm:$0xf]
    %v121 = vld [vmem:[#allocation8 + $0x5c] sm:$0xf]
    %v122 = vld [vmem:[#allocation8 + $0x60] sm:$0xf]
    %v123 = vld [vmem:[#allocation8 + $0x64] sm:$0xf]
    %v124 = vld [vmem:[#allocation8 + $0x68] sm:$0xf]
    %v125 = vld [vmem:[#allocation8 + $0x6c] sm:$0xf]
    %v126 = vld [vmem:[#allocation8 + $0x70] sm:$0xf]
    %v127 = vld [vmem:[#allocation8 + $0x74] sm:$0xf]
    %v128 = vld [vmem:[#allocation8 + $0x78] sm:$0xf]
    %v129 = vld [vmem:[#allocation8 + $0x7c] sm:$0xf]
    %v130 = vld [vmem:[#allocation8 + $0x80] sm:$0xf]
    %v131 = vld [vmem:[#allocation8 + $0x84] sm:$0xf]
    %v132 = vld [vmem:[#allocation8 + $0x88] sm:$0xf]
    %v133 = vld [vmem:[#allocation8 + $0x8c] sm:$0xf]
    %v134 = vld [vmem:[#allocation8 + $0x90] sm:$0xf]
    %v135 = vld [vmem:[#allocation8 + $0x94] sm:$0xf]
    %v136 = vld [vmem:[#allocation8 + $0x98] sm:$0xf]
    %v137 = vld [vmem:[#allocation8 + $0x9c] sm:$0xf]
    %v138 = vld [vmem:[#allocation8 + $0xa0] sm:$0xf]
    %v139 = vld [vmem:[#allocation8 + $0xa4] sm:$0xf]
    %v140 = vld [vmem:[#allocation8 + $0xa8] sm:$0xf]
    %v141 = vld [vmem:[#allocation8 + $0xac] sm:$0xf]
    %v142 = vld [vmem:[#allocation8 + $0xb0] sm:$0xf]
    %v143 = vld [vmem:[#allocation8 + $0xb4] sm:$0xf]
    %v144 = vld [vmem:[#allocation8 + $0xb8] sm:$0xf]
    %v145 = vld [vmem:[#allocation8 + $0xbc] sm:$0xf]
    %v146 = vld [vmem:[#allocation8 + $0xc0] sm:$0xf]
    %v147 = vld [vmem:[#allocation8 + $0xc4] sm:$0xf]
    %v148 = vld [vmem:[#allocation8 + $0xc8] sm:$0xf]
    %v149 = vld [vmem:[#allocation8 + $0xcc] sm:$0xf]
    %v150 = vld [vmem:[#allocation8 + $0xd0] sm:$0xf]
    %v151 = vld [vmem:[#allocation8 + $0xd4] sm:$0xf]
    %v152 = vld [vmem:[#allocation8 + $0xd8] sm:$0xf]
    %v153 = vld [vmem:[#allocation8 + $0xdc] sm:$0xf]
    %v154 = vld [vmem:[#allocation8 + $0xe0] sm:$0xf]
    %v155 = vld [vmem:[#allocation8 + $0xe4] sm:$0xf]
    %v156 = vld [vmem:[#allocation8 + $0xe8] sm:$0xf]
    %v157 = vld [vmem:[#allocation8 + $0xec] sm:$0xf]
    %v158 = vld [vmem:[#allocation8 + $0xf0] sm:$0xf]
    %v159 = vld [vmem:[#allocation8 + $0xf4] sm:$0xf]
    %v160 = vld [vmem:[#allocation8 + $0xf8] sm:$0xf]
    %v161 = vld [vmem:[#allocation8 + $0xfc] sm:$0xf]
    %v162 = vld [vmem:[#allocation8 + $0x100] sm:$0xf]
    %v163 = vld [vmem:[#allocation8 + $0x104] sm:$0xf]
    %v164 = vld [vmem:[#allocation8 + $0x108] sm:$0xf]
    %v165 = vld [vmem:[#allocation8 + $0x10c] sm:$0xf]
    %v166 = vld [vmem:[#allocation8 + $0x110] sm:$0xf]
    %v167 = vld [vmem:[#allocation8 + $0x114] sm:$0xf]
    %v168 = vld [vmem:[#allocation8 + $0x118] sm:$0xf]
    %v169 = vld [vmem:[#allocation8 + $0x11c] sm:$0xf]
    %v170 = vld [vmem:[#allocation8 + $0x120] sm:$0xf]
    %v171 = vld [vmem:[#allocation8 + $0x124] sm:$0xf]
    %v172 = vld [vmem:[#allocation8 + $0x128] sm:$0xf]
    %v173 = vld [vmem:[#allocation8 + $0x12c] sm:$0xf]
    %v174 = vld [vmem:[#allocation8 + $0x130] sm:$0xf]
    %v175 = vld [vmem:[#allocation8 + $0x134] sm:$0xf]
    %v176 = vld [vmem:[#allocation8 + $0x138] sm:$0xf]
    %v177 = vld [vmem:[#allocation8 + $0x13c] sm:$0xf]
    %v178 = vld [vmem:[#allocation8 + $0x140] sm:$0xf]
    %v179 = vld [vmem:[#allocation8 + $0x144] sm:$0xf]
    %v180 = vld [vmem:[#allocation8 + $0x148] sm:$0xf]
    %v181 = vld [vmem:[#allocation8 + $0x14c] sm:$0xf]
    %v182 = vld [vmem:[#allocation8 + $0x150] sm:$0xf]
    %v183 = vld [vmem:[#allocation8 + $0x154] sm:$0xf]
    %v184 = vld [vmem:[#allocation8 + $0x158] sm:$0xf]
    %v185 = vld [vmem:[#allocation8 + $0x15c] sm:$0xf]
    %v186 = vld [vmem:[#allocation8 + $0x160] sm:$0xf]
    %v187 = vld [vmem:[#allocation8 + $0x164] sm:$0xf]
    %v188 = vld [vmem:[#allocation8 + $0x168] sm:$0xf]
    %v189 = vld [vmem:[#allocation8 + $0x16c] sm:$0xf]
    %v190 = vld [vmem:[#allocation8 + $0x170] sm:$0xf]
    %v191 = vld [vmem:[#allocation8 + $0x174] sm:$0xf]
    %v192 = vld [vmem:[#allocation8 + $0x178] sm:$0xf]
    %v193 = vld [vmem:[#allocation8 + $0x17c] sm:$0xf]
    %v194 = vld [vmem:[#allocation8 + $0x180] sm:$0xf]
    %v195 = vld [vmem:[#allocation8 + $0x184] sm:$0xf]
    %v196 = vld [vmem:[#allocation8 + $0x188] sm:$0xf]
    %v197 = vld [vmem:[#allocation8 + $0x18c] sm:$0xf]
    %v198 = vld [vmem:[#allocation8 + $0x190] sm:$0xf]
    %v199 = vld [vmem:[#allocation8 + $0x194] sm:$0xf]
    %v200 = vld [vmem:[#allocation8 + $0x198] sm:$0xf]
    %v201 = vld [vmem:[#allocation8 + $0x19c] sm:$0xf]
    %v202 = vld [vmem:[#allocation8 + $0x1a0] sm:$0xf]
    %v203 = vld [vmem:[#allocation8 + $0x1a4] sm:$0xf]
    %v204 = vld [vmem:[#allocation8 + $0x1a8] sm:$0xf]
    %v205 = vld [vmem:[#allocation8 + $0x1ac] sm:$0xf]
    %v206 = vld [vmem:[#allocation8 + $0x1b0] sm:$0xf]
    %v207 = vld [vmem:[#allocation8 + $0x1b4] sm:$0xf]
    %v208 = vld [vmem:[#allocation8 + $0x1b8] sm:$0xf]
    %v209 = vld [vmem:[#allocation8 + $0x1bc] sm:$0xf]
    %v210 = vld [vmem:[#allocation8 + $0x1c0] sm:$0xf]
    %v211 = vld [vmem:[#allocation8 + $0x1c4] sm:$0xf]
    %v212 = vld [vmem:[#allocation8 + $0x1c8] sm:$0xf]
    %v213 = vld [vmem:[#allocation8 + $0x1cc] sm:$0xf]
    %v214 = vld [vmem:[#allocation8 + $0x1d0] sm:$0xf]
    %v215 = vld [vmem:[#allocation8 + $0x1d4] sm:$0xf]
    %v216 = vld [vmem:[#allocation8 + $0x1d8] sm:$0xf]
    %v217 = vld [vmem:[#allocation8 + $0x1dc] sm:$0xf]
    %v218 = vld [vmem:[#allocation8 + $0x1e0] sm:$0xf]
    %v219 = vld [vmem:[#allocation8 + $0x1e4] sm:$0xf]
    %v220 = vld [vmem:[#allocation8 + $0x1e8] sm:$0xf]
    %v221 = vld [vmem:[#allocation8 + $0x1ec] sm:$0xf]
    %v222 = vld [vmem:[#allocation8 + $0x1f0] sm:$0xf]
    %v223 = vld [vmem:[#allocation8 + $0x1f4] sm:$0xf]
    %v224 = vld [vmem:[#allocation8 + $0x1f8] sm:$0xf]
    %v225 = vld [vmem:[#allocation8 + $0x1fc] sm:$0xf]
    %v226 = vld [vmem:[#allocation10] sm:$0xff]
    %v227 = vld [vmem:[#allocation10 + $0x8] sm:$0xff]
    %v228 = vld [vmem:[#allocation2] sm:$0xff]
    %v229 = vld [vmem:[#allocation2 + $0x8] sm:$0xff]
    %v230 = vld [vmem:[#allocation2 + $0x10] sm:$0xff]
    %v231 = vld [vmem:[#allocation2 + $0x18] sm:$0xff]
    %v232 = vld [vmem:[#allocation2 + $0x20] sm:$0xff]
    %v233 = vld [vmem:[#allocation2 + $0x28] sm:$0xff]
    %v234 = vld [vmem:[#allocation2 + $0x30] sm:$0xff]
    %v235 = vld [vmem:[#allocation2 + $0x38] sm:$0xff]
    %v236 = vld [vmem:[#allocation5] sm:$0xf]
    %v237 = vld [vmem:[#allocation5 + $0x4] sm:$0xf]
    %v238 = vld [vmem:[#allocation5 + $0x8] sm:$0xf]
    %v239 = vld [vmem:[#allocation5 + $0xc] sm:$0xf]
    %v240 = vld [vmem:[#allocation5 + $0x10] sm:$0xf]
    %v241 = vld [vmem:[#allocation5 + $0x14] sm:$0xf]
    %v242 = vld [vmem:[#allocation5 + $0x18] sm:$0xf]
    %v243 = vld [vmem:[#allocation5 + $0x1c] sm:$0xf]
    %v244 = vpack.c.bf16 %v229, %v228
    %v245 = vpack.c.bf16 %v231, %v230
    %v246 = vpack.c.bf16 %v233, %v232
    %v247 = vpack.c.bf16 %v235, %v234
    %v256 = vunpack.c.l.b16 %v236
    %v257 = vunpack.c.l.b16 %v237
    %v258 = vunpack.c.l.b16 %v238
    %v259 = vunpack.c.l.b16 %v239
    %v260 = vunpack.c.l.b16 %v240
    %v261 = vunpack.c.l.b16 %v241
    %v262 = vunpack.c.l.b16 %v242
    %v263 = vunpack.c.l.b16 %v243
    %v264 = vpack.c.b16 %v257, %v256
    %v265 = vpack.c.b16 %v259, %v258
    %v266 = vpack.c.b16 %v261, %v260
    %v267 = vpack.c.b16 %v263, %v262
    %vm268 = vcmask 523264
    %v270 = vsel %vm268, %v264, 0
    %v273 = vsel %vm268, %v265, 0
    %v276 = vsel %vm268, %v266, 0
    %v279 = vsel %vm268, %v267, 0
    %281 = vmatpush.bf16.msra.mxu0 0
    %282 = vmatpush.bf16.msra.mxu0 0
    %283 = vmatpush.bf16.msra.mxu0 0
    %284 = vmatpush.bf16.msra.mxu0 0
    %285 = vmatpush.bf16.msra.mxu0 %v247
    %286 = vmatpush.bf16.msra.mxu0 %v246
    %287 = vmatpush.bf16.msra.mxu0 %v245
    %288 = vmatpush.bf16.msra.mxu0 %v244
    %289 = vmatmul.bf16.gmra.mxu0 %v270
    %v290 = vpop.f32.mrf.mxu0
    %v291 = vadd.f32 0.0, %v290
    %v292 = vpop.f32.mrf.mxu0
    %v293 = vadd.f32 0.0, %v292
    %294 = vmatmul.bf16.gmra.mxu0 %v273
    %v295 = vpop.f32.mrf.mxu0
    %v296 = vadd.f32 0.0, %v295
    %v297 = vpop.f32.mrf.mxu0
    %v298 = vadd.f32 0.0, %v297
    %299 = vmatmul.bf16.gmra.mxu0 %v276
    %v300 = vpop.f32.mrf.mxu0
    %v301 = vadd.f32 0.0, %v300
    %v302 = vpop.f32.mrf.mxu0
    %v303 = vadd.f32 0.0, %v302
    %304 = vmatmul.bf16.gmra.mxu0 %v279
    %v305 = vpop.f32.mrf.mxu0
    %v306 = vadd.f32 0.0, %v305
    %v307 = vpop.f32.mrf.mxu0
    %v308 = vadd.f32 0.0, %v307
    %309 = vdwg.mxu0
    %v310 = vadd.f32 %v228, %v291
    %v311 = vadd.f32 %v229, %v293
    %v312 = vadd.f32 %v230, %v296
    %v313 = vadd.f32 %v231, %v298
    %v314 = vadd.f32 %v232, %v301
    %v315 = vadd.f32 %v233, %v303
    %v316 = vadd.f32 %v234, %v306
    %v317 = vadd.f32 %v235, %v308
    %v318 = vpack.c.bf16 %v311, %v310
    %v319 = vpack.c.bf16 %v313, %v312
    %v320 = vpack.c.bf16 %v315, %v314
    %v321 = vpack.c.bf16 %v317, %v316
    %v322 = vperm.slane %v226, 0
    %v339 = vunpack.c.l.b16 %v98
    %v340 = vunpack.c.l.b16 %v99
    %v341 = vunpack.c.l.b16 %v100
    %v342 = vunpack.c.l.b16 %v101
    %v343 = vunpack.c.l.b16 %v102
    %v344 = vunpack.c.l.b16 %v103
    %v345 = vunpack.c.l.b16 %v104
    %v346 = vunpack.c.l.b16 %v105
    %v347 = vunpack.c.l.b16 %v106
    %v348 = vunpack.c.l.b16 %v107
    %v349 = vunpack.c.l.b16 %v108
    %v350 = vunpack.c.l.b16 %v109
    %v351 = vunpack.c.l.b16 %v110
    %v352 = vunpack.c.l.b16 %v111
    %v353 = vunpack.c.l.b16 %v112
    %v354 = vunpack.c.l.b16 %v113
    %v355 = vpack.c.b16 %v340, %v339
    %v356 = vpack.c.b16 %v342, %v341
    %v357 = vpack.c.b16 %v344, %v343
    %v358 = vpack.c.b16 %v346, %v345
    %v359 = vpack.c.b16 %v348, %v347
    %v360 = vpack.c.b16 %v350, %v349
    %v361 = vpack.c.b16 %v352, %v351
    %v362 = vpack.c.b16 %v354, %v353
    %371 = vmatpush.bf16.msra.mxu0 %v362
    %372 = vmatpush.bf16.msra.mxu0 %v361
    %373 = vmatpush.bf16.msra.mxu0 %v360
    %374 = vmatpush.bf16.msra.mxu0 %v359
    %375 = vmatpush.bf16.msra.mxu0 %v358
    %376 = vmatpush.bf16.msra.mxu0 %v357
    %377 = vmatpush.bf16.msra.mxu0 %v356
    %378 = vmatpush.bf16.msra.mxu0 %v355
    %379 = vmatmul.bf16.gmra.mxu0 %v318
    %v380 = vpop.f32.mrf.mxu0
    %v381 = vadd.f32 %v322, %v380
    %v382 = vpop.f32.mrf.mxu0
    %v383 = vadd.f32 %v322, %v382
    %384 = vmatmul.bf16.gmra.mxu0 %v319
    %v385 = vpop.f32.mrf.mxu0
    %v386 = vadd.f32 %v322, %v385
    %v387 = vpop.f32.mrf.mxu0
    %v388 = vadd.f32 %v322, %v387
    %389 = vmatmul.bf16.gmra.mxu0 %v320
    %v390 = vpop.f32.mrf.mxu0
    %v391 = vadd.f32 %v322, %v390
    %v392 = vpop.f32.mrf.mxu0
    %v393 = vadd.f32 %v322, %v392
    %394 = vmatmul.bf16.gmra.mxu0 %v321
    %v395 = vpop.f32.mrf.mxu0
    %v396 = vadd.f32 %v322, %v395
    %v397 = vpop.f32.mrf.mxu0
    %v398 = vadd.f32 %v322, %v397
    %399 = vdwg.mxu0
    %v400 = vmax.f32 %v381, 0.0
    %v401 = vmax.f32 %v383, 0.0
    %v402 = vmax.f32 %v386, 0.0
    %v403 = vmax.f32 %v388, 0.0
    %v404 = vmax.f32 %v391, 0.0
    %v405 = vmax.f32 %v393, 0.0
    %v406 = vmax.f32 %v396, 0.0
    %v407 = vmax.f32 %v398, 0.0
    %v408 = vpack.c.bf16 %v401, %v400
    %v409 = vpack.c.bf16 %v403, %v402
    %v410 = vpack.c.bf16 %v405, %v404
    %v411 = vpack.c.bf16 %v407, %v406
    %v412 = vperm.slane %v226, 1
    %v429 = vunpack.c.l.b16 %v114
    %v430 = vunpack.c.l.b16 %v115
    %v431 = vunpack.c.l.b16 %v116
    %v432 = vunpack.c.l.b16 %v117
    %v433 = vunpack.c.l.b16 %v118
    %v434 = vunpack.c.l.b16 %v119
    %v435 = vunpack.c.l.b16 %v120
    %v436 = vunpack.c.l.b16 %v121
    %v437 = vunpack.c.l.b16 %v122
    %v438 = vunpack.c.l.b16 %v123
    %v439 = vunpack.c.l.b16 %v124
    %v440 = vunpack.c.l.b16 %v125
    %v441 = vunpack.c.l.b16 %v126
    %v442 = vunpack.c.l.b16 %v127
    %v443 = vunpack.c.l.b16 %v128
    %v444 = vunpack.c.l.b16 %v129
    %v445 = vpack.c.b16 %v430, %v429
    %v446 = vpack.c.b16 %v432, %v431
    %v447 = vpack.c.b16 %v434, %v433
    %v448 = vpack.c.b16 %v436, %v435
    %v449 = vpack.c.b16 %v438, %v437
    %v450 = vpack.c.b16 %v440, %v439
    %v451 = vpack.c.b16 %v442, %v441
    %v452 = vpack.c.b16 %v444, %v443
    %461 = vmatpush.bf16.msra.mxu0 %v452
    %462 = vmatpush.bf16.msra.mxu0 %v451
    %463 = vmatpush.bf16.msra.mxu0 %v450
    %464 = vmatpush.bf16.msra.mxu0 %v449
    %465 = vmatpush.bf16.msra.mxu0 %v448
    %466 = vmatpush.bf16.msra.mxu0 %v447
    %467 = vmatpush.bf16.msra.mxu0 %v446
    %468 = vmatpush.bf16.msra.mxu0 %v445
    %469 = vmatmul.bf16.gmra.mxu0 %v408
    %v470 = vpop.f32.mrf.mxu0
    %v471 = vadd.f32 %v412, %v470
    %v472 = vpop.f32.mrf.mxu0
    %v473 = vadd.f32 %v412, %v472
    %474 = vmatmul.bf16.gmra.mxu0 %v409
    %v475 = vpop.f32.mrf.mxu0
    %v476 = vadd.f32 %v412, %v475
    %v477 = vpop.f32.mrf.mxu0
    %v478 = vadd.f32 %v412, %v477
    %479 = vmatmul.bf16.gmra.mxu0 %v410
    %v480 = vpop.f32.mrf.mxu0
    %v481 = vadd.f32 %v412, %v480
    %v482 = vpop.f32.mrf.mxu0
    %v483 = vadd.f32 %v412, %v482
    %484 = vmatmul.bf16.gmra.mxu0 %v411
    %v485 = vpop.f32.mrf.mxu0
    %v486 = vadd.f32 %v412, %v485
    %v487 = vpop.f32.mrf.mxu0
    %v488 = vadd.f32 %v412, %v487
    %489 = vdwg.mxu0
    %v490 = vmax.f32 %v471, 0.0
    %v491 = vmax.f32 %v473, 0.0
    %v492 = vmax.f32 %v476, 0.0
    %v493 = vmax.f32 %v478, 0.0
    %v494 = vmax.f32 %v481, 0.0
    %v495 = vmax.f32 %v483, 0.0
    %v496 = vmax.f32 %v486, 0.0
    %v497 = vmax.f32 %v488, 0.0
    %v498 = vadd.f32 %v490, %v491
    %v499 = vadd.f32 %v498, %v492
    %v500 = vadd.f32 %v499, %v493
    %v501 = vadd.f32 %v500, %v494
    %v502 = vadd.f32 %v501, %v495
    %v503 = vadd.f32 %v502, %v496
    %v504 = vadd.f32 %v503, %v497
    %v505 = vrot.slane %v504, 4
    %v506 = vadd.f32 %v504, %v505
    %v507 = vrot.slane %v506, 2
    %v508 = vadd.f32 %v506, %v507
    %v509 = vrot.slane %v508, 1
    %v510 = vadd.f32 %v508, %v509
    %v511 = vrcp.pop 64.0
    %v512 = vmul.f32 64.0, %v511
    %v513 = vsub.f32 1.0, %v512
    %v514 = vmul.f32 %v511, %v513
    %v515 = vadd.f32 %v511, %v514
    %vm516 = vweird.f32 %v511
    %v517 = vsel %vm516, %v511, %v515
    %v518 = vmul.f32 %v510, %v517
    %v519 = vmul.f32 %v490, %v490
    %v520 = vmul.f32 %v491, %v491
    %v521 = vmul.f32 %v492, %v492
    %v522 = vmul.f32 %v493, %v493
    %v523 = vmul.f32 %v494, %v494
    %v524 = vmul.f32 %v495, %v495
    %v525 = vmul.f32 %v496, %v496
    %v526 = vmul.f32 %v497, %v497
    %v527 = vadd.f32 %v519, %v520
    %v528 = vadd.f32 %v527, %v521
    %v529 = vadd.f32 %v528, %v522
    %v530 = vadd.f32 %v529, %v523
    %v531 = vadd.f32 %v530, %v524
    %v532 = vadd.f32 %v531, %v525
    %v533 = vadd.f32 %v532, %v526
    %v534 = vrot.slane %v533, 4
    %v535 = vadd.f32 %v533, %v534
    %v536 = vrot.slane %v535, 2
    %v537 = vadd.f32 %v535, %v536
    %v538 = vrot.slane %v537, 1
    %v539 = vadd.f32 %v537, %v538
    %v540 = vmul.f32 %v539, %v517
    %v541 = vmul.f32 %v518, %v518
    %v542 = vsub.f32 %v540, %v541
    %v543 = vmax.f32 %v542, 0.0
    %v544 = vadd.f32 %v543, 1e-05
    %v545 = vrsqrt.pop %v544
    %v546 = vmul.f32 %v545, %v544
    %v547 = vmul.f32 %v546, %v545
    %v548 = vmul.f32 0.5, %v547
    %v549 = vsub.f32 1.5, %v548
    %v550 = vmul.f32 %v545, %v549
    %vm551 = vweird.f32 %v544
    %vm552 = vweird.f32 %v545
    %vm553 = vmor %vm551, %vm552
    %v554 = vsel %vm553, %v545, %v550
    %v555 = vmul.f32 %v226, %v554
    %v556 = vmul.f32 %v518, %v555
    %v558 = vrot.slane %v556, 7
    %v560 = vsub.f32 %v226, %v558
    %v561 = vperm.slane %v555, 2
    %v562 = vmul.f32 %v490, %v561
    %v563 = vmul.f32 %v491, %v561
    %v564 = vmul.f32 %v492, %v561
    %v565 = vmul.f32 %v493, %v561
    %v566 = vmul.f32 %v494, %v561
    %v567 = vmul.f32 %v495, %v561
    %v568 = vmul.f32 %v496, %v561
    %v569 = vmul.f32 %v497, %v561
    %v570 = vperm.slane %v560, 3
    %v571 = vadd.f32 %v562, %v570
    %v572 = vadd.f32 %v563, %v570
    %v573 = vadd.f32 %v564, %v570
    %v574 = vadd.f32 %v565, %v570
    %v575 = vadd.f32 %v566, %v570
    %v576 = vadd.f32 %v567, %v570
    %v577 = vadd.f32 %v568, %v570
    %v578 = vadd.f32 %v569, %v570
    %v579 = vpack.c.bf16 %v572, %v571
    %v580 = vpack.c.bf16 %v574, %v573
    %v581 = vpack.c.bf16 %v576, %v575
    %v582 = vpack.c.bf16 %v578, %v577
    %v599 = vunpack.c.l.b16 %v130
    %v600 = vunpack.c.l.b16 %v131
    %v601 = vunpack.c.l.b16 %v132
    %v602 = vunpack.c.l.b16 %v133
    %v603 = vunpack.c.l.b16 %v134
    %v604 = vunpack.c.l.b16 %v135
    %v605 = vunpack.c.l.b16 %v136
    %v606 = vunpack.c.l.b16 %v137
    %v607 = vunpack.c.l.b16 %v138
    %v608 = vunpack.c.l.b16 %v139
    %v609 = vunpack.c.l.b16 %v140
    %v610 = vunpack.c.l.b16 %v141
    %v611 = vunpack.c.l.b16 %v142
    %v612 = vunpack.c.l.b16 %v143
    %v613 = vunpack.c.l.b16 %v144
    %v614 = vunpack.c.l.b16 %v145
    %v615 = vpack.c.b16 %v600, %v599
    %v616 = vpack.c.b16 %v602, %v601
    %v617 = vpack.c.b16 %v604, %v603
    %v618 = vpack.c.b16 %v606, %v605
    %v619 = vpack.c.b16 %v608, %v607
    %v620 = vpack.c.b16 %v610, %v609
    %v621 = vpack.c.b16 %v612, %v611
    %v622 = vpack.c.b16 %v614, %v613
    %631 = vmatpush.bf16.msra.mxu0 %v622
    %632 = vmatpush.bf16.msra.mxu0 %v621
    %633 = vmatpush.bf16.msra.mxu0 %v620
    %634 = vmatpush.bf16.msra.mxu0 %v619
    %635 = vmatpush.bf16.msra.mxu0 %v618
    %636 = vmatpush.bf16.msra.mxu0 %v617
    %637 = vmatpush.bf16.msra.mxu0 %v616
    %638 = vmatpush.bf16.msra.mxu0 %v615
    %639 = vmatmul.bf16.gmra.mxu0 %v579
    %v640 = vpop.f32.mrf.mxu0
    %v641 = vadd.f32 0.0, %v640
    %v642 = vpop.f32.mrf.mxu0
    %v643 = vadd.f32 0.0, %v642
    %644 = vmatmul.bf16.gmra.mxu0 %v580
    %v645 = vpop.f32.mrf.mxu0
    %v646 = vadd.f32 0.0, %v645
    %v647 = vpop.f32.mrf.mxu0
    %v648 = vadd.f32 0.0, %v647
    %649 = vmatmul.bf16.gmra.mxu0 %v581
    %v650 = vpop.f32.mrf.mxu0
    %v651 = vadd.f32 0.0, %v650
    %v652 = vpop.f32.mrf.mxu0
    %v653 = vadd.f32 0.0, %v652
    %654 = vmatmul.bf16.gmra.mxu0 %v582
    %v655 = vpop.f32.mrf.mxu0
    %v656 = vadd.f32 0.0, %v655
    %v657 = vpop.f32.mrf.mxu0
    %v658 = vadd.f32 0.0, %v657
    %659 = vdwg.mxu0
    %v660 = vperm.slane %v226, 5
    %v661 = vmul.f32 %v641, %v660
    %v662 = vmul.f32 %v643, %v660
    %v663 = vmul.f32 %v646, %v660
    %v664 = vmul.f32 %v648, %v660
    %v665 = vmul.f32 %v651, %v660
    %v666 = vmul.f32 %v653, %v660
    %v667 = vmul.f32 %v656, %v660
    %v668 = vmul.f32 %v658, %v660
    %669 = vadd.xlane.f32.xlu0 %v661
    %v670 = vpop.xlane.xlu0 %669
    %671 = vadd.xlane.f32.xlu0 %v662
    %v672 = vpop.xlane.xlu0 %671
    %673 = vadd.xlane.f32.xlu0 %v663
    %v674 = vpop.xlane.xlu0 %673
    %675 = vadd.xlane.f32.xlu0 %v664
    %v676 = vpop.xlane.xlu0 %675
    %677 = vadd.xlane.f32.xlu0 %v665
    %v678 = vpop.xlane.xlu0 %677
    %679 = vadd.xlane.f32.xlu0 %v666
    %v680 = vpop.xlane.xlu0 %679
    %681 = vadd.xlane.f32.xlu0 %v667
    %v682 = vpop.xlane.xlu0 %681
    %683 = vadd.xlane.f32.xlu0 %v668
    %v684 = vpop.xlane.xlu0 %683
    %v686 = vrot.slane %v226, 4
    %688 = vmatpush.xpose.msra.mxu0 0.0
    %689 = vmatpush.xpose.msra.mxu0 0.0
    %690 = vmatpush.xpose.msra.mxu0 0.0
    %691 = vmatpush.xpose.msra.mxu0 0.0
    %692 = vmatpush.xpose.msra.mxu0 0.0
    %693 = vmatpush.xpose.msra.mxu0 0.0
    %694 = vmatpush.xpose.msra.mxu0 0.0
    %695 = vmatpush.xpose.msra.mxu0 0.0
    %696 = vmatpush.xpose.msra.mxu0 %v658
    %697 = vmatpush.xpose.msra.mxu0 %v656
    %698 = vmatpush.xpose.msra.mxu0 %v653
    %699 = vmatpush.xpose.msra.mxu0 %v651
    %700 = vmatpush.xpose.msra.mxu0 %v648
    %701 = vmatpush.xpose.msra.mxu0 %v646
    %702 = vmatpush.xpose.msra.mxu0 %v643
    %703 = vmatpush.xpose.msra.mxu0 %v641
    %704 = vmatmul.f32.gmra.mxu0 %v686
    %v705 = vpop.f32.mrf.mxu0
    %v706 = vadd.f32 0.0, %v705
    %707 = vdwg.mxu0
    %v708 = vperm.slane %v706, 0
    %v709 = vadd.f32 %v670, %v708
    %v710 = vadd.f32 %v672, %v708
    %v711 = vadd.f32 %v674, %v708
    %v712 = vadd.f32 %v676, %v708
    %v713 = vadd.f32 %v678, %v708
    %v714 = vadd.f32 %v680, %v708
    %v715 = vadd.f32 %v682, %v708
    %v716 = vadd.f32 %v684, %v708
    %vm717 = vcmp.gt.f32.partialorder %v709, 0.0
    %vm718 = vcmp.gt.f32.partialorder %v710, 0.0
    %vm719 = vcmp.gt.f32.partialorder %v711, 0.0
    %vm720 = vcmp.gt.f32.partialorder %v712, 0.0
    %vm721 = vcmp.gt.f32.partialorder %v713, 0.0
    %vm722 = vcmp.gt.f32.partialorder %v714, 0.0
    %vm723 = vcmp.gt.f32.partialorder %v715, 0.0
    %vm724 = vcmp.gt.f32.partialorder %v716, 0.0
    %v725 = vmul.f32 %v709, 0.2
    %v726 = vmul.f32 %v710, 0.2
    %v727 = vmul.f32 %v711, 0.2
    %v728 = vmul.f32 %v712, 0.2
    %v729 = vmul.f32 %v713, 0.2
    %v730 = vmul.f32 %v714, 0.2
    %v731 = vmul.f32 %v715, 0.2
    %v732 = vmul.f32 %v716, 0.2
    %v733 = vsel %vm717, %v709, %v725
    %v734 = vsel %vm718, %v710, %v726
    %v735 = vsel %vm719, %v711, %v727
    %v736 = vsel %vm720, %v712, %v728
    %v737 = vsel %vm721, %v713, %v729
    %v738 = vsel %vm722, %v714, %v730
    %v739 = vsel %vm723, %v715, %v731
    %v740 = vsel %vm724, %v716, %v732
    %v741 = vlaneseq
    %v742 = vshrl.u32 %v741, 7
    %v743 = vadd.s32 %v742, 8
    %v744 = vadd.s32 %v742, 16
    %v745 = vadd.s32 %v742, 24
    %v746 = vadd.s32 %v742, 32
    %v747 = vadd.s32 %v742, 40
    %v748 = vadd.s32 %v742, 48
    %v749 = vadd.s32 %v742, 56
    %v750 = vlaneseq
    %v751 = vand.u32 %v750, 127
    %v752 = vunpack.c.l.bf16 %v236
    %v753 = vunpack.c.l.bf16 %v237
    %v754 = vunpack.c.l.bf16 %v238
    %v755 = vunpack.c.l.bf16 %v239
    %v756 = vunpack.c.l.bf16 %v240
    %v757 = vunpack.c.l.bf16 %v241
    %v758 = vunpack.c.l.bf16 %v242
    %v759 = vunpack.c.l.bf16 %v243
    %vm760 = vcmp.gt.f32.partialorder %v752, 0.0
    %vm761 = vcmp.gt.f32.partialorder %v753, 0.0
    %vm762 = vcmp.gt.f32.partialorder %v754, 0.0
    %vm763 = vcmp.gt.f32.partialorder %v755, 0.0
    %vm764 = vcmp.gt.f32.partialorder %v756, 0.0
    %vm765 = vcmp.gt.f32.partialorder %v757, 0.0
    %vm766 = vcmp.gt.f32.partialorder %v758, 0.0
    %vm767 = vcmp.gt.f32.partialorder %v759, 0.0
    %vm768 = vcmp.eq.s32.totalorder %v742, %v751
    %vm769 = vcmp.eq.s32.totalorder %v743, %v751
    %vm770 = vcmp.eq.s32.totalorder %v744, %v751
    %vm771 = vcmp.eq.s32.totalorder %v745, %v751
    %vm772 = vcmp.eq.s32.totalorder %v746, %v751
    %vm773 = vcmp.eq.s32.totalorder %v747, %v751
    %vm774 = vcmp.eq.s32.totalorder %v748, %v751
    %vm775 = vcmp.eq.s32.totalorder %v749, %v751
    %vm776 = vmor %vm760, %vm768
    %vm777 = vmor %vm761, %vm769
    %vm778 = vmor %vm762, %vm770
    %vm779 = vmor %vm763, %vm771
    %vm780 = vmor %vm764, %vm772
    %vm781 = vmor %vm765, %vm773
    %vm782 = vmor %vm766, %vm774
    %vm783 = vmor %vm767, %vm775
    %v784 = vsel %vm776, %v733, -1e+30
    %v785 = vsel %vm777, %v734, -1e+30
    %v786 = vsel %vm778, %v735, -1e+30
    %v787 = vsel %vm779, %v736, -1e+30
    %v788 = vsel %vm780, %v737, -1e+30
    %v789 = vsel %vm781, %v738, -1e+30
    %v790 = vsel %vm782, %v739, -1e+30
    %v791 = vsel %vm783, %v740, -1e+30
    %v792 = vsel %vm268, %v784, -inf
    %793 = vmax.xlane.f32.xlu0 %v792
    %v794 = vpop.xlane.xlu0 %793
    %v795 = vsel %vm268, %v785, -inf
    %796 = vmax.xlane.f32.xlu0 %v795
    %v797 = vpop.xlane.xlu0 %796
    %v798 = vsel %vm268, %v786, -inf
    %799 = vmax.xlane.f32.xlu0 %v798
    %v800 = vpop.xlane.xlu0 %799
    %v801 = vsel %vm268, %v787, -inf
    %802 = vmax.xlane.f32.xlu0 %v801
    %v803 = vpop.xlane.xlu0 %802
    %v804 = vsel %vm268, %v788, -inf
    %805 = vmax.xlane.f32.xlu0 %v804
    %v806 = vpop.xlane.xlu0 %805
    %v807 = vsel %vm268, %v789, -inf
    %808 = vmax.xlane.f32.xlu0 %v807
    %v809 = vpop.xlane.xlu0 %808
    %v810 = vsel %vm268, %v790, -inf
    %811 = vmax.xlane.f32.xlu0 %v810
    %v812 = vpop.xlane.xlu0 %811
    %v813 = vsel %vm268, %v791, -inf
    %814 = vmax.xlane.f32.xlu0 %v813
    %v815 = vpop.xlane.xlu0 %814
    %v816 = vsub.f32 %v784, %v794
    %v817 = vsub.f32 %v785, %v797
    %v818 = vsub.f32 %v786, %v800
    %v819 = vsub.f32 %v787, %v803
    %v820 = vsub.f32 %v788, %v806
    %v821 = vsub.f32 %v789, %v809
    %v822 = vsub.f32 %v790, %v812
    %v823 = vsub.f32 %v791, %v815
    %v824 = vmul.f32 %v816, 1.442695
    %v825 = vpow.pop %v824
    %v826 = vmul.f32 %v817, 1.442695
    %v827 = vpow.pop %v826
    %v828 = vmul.f32 %v818, 1.442695
    %v829 = vpow.pop %v828
    %v830 = vmul.f32 %v819, 1.442695
    %v831 = vpow.pop %v830
    %v832 = vmul.f32 %v820, 1.442695
    %v833 = vpow.pop %v832
    %v834 = vmul.f32 %v821, 1.442695
    %v835 = vpow.pop %v834
    %v836 = vmul.f32 %v822, 1.442695
    %v837 = vpow.pop %v836
    %v838 = vmul.f32 %v823, 1.442695
    %v839 = vpow.pop %v838
    %v840 = vsel %vm268, %v825, 0.0
    %841 = vadd.xlane.f32.xlu0 %v840
    %v842 = vpop.xlane.xlu0 %841
    %v843 = vsel %vm268, %v827, 0.0
    %844 = vadd.xlane.f32.xlu0 %v843
    %v845 = vpop.xlane.xlu0 %844
    %v846 = vsel %vm268, %v829, 0.0
    %847 = vadd.xlane.f32.xlu0 %v846
    %v848 = vpop.xlane.xlu0 %847
    %v849 = vsel %vm268, %v831, 0.0
    %850 = vadd.xlane.f32.xlu0 %v849
    %v851 = vpop.xlane.xlu0 %850
    %v852 = vsel %vm268, %v833, 0.0
    %853 = vadd.xlane.f32.xlu0 %v852
    %v854 = vpop.xlane.xlu0 %853
    %v855 = vsel %vm268, %v835, 0.0
    %856 = vadd.xlane.f32.xlu0 %v855
    %v857 = vpop.xlane.xlu0 %856
    %v858 = vsel %vm268, %v837, 0.0
    %859 = vadd.xlane.f32.xlu0 %v858
    %v860 = vpop.xlane.xlu0 %859
    %v861 = vsel %vm268, %v839, 0.0
    %862 = vadd.xlane.f32.xlu0 %v861
    %v863 = vpop.xlane.xlu0 %862
    %v864 = vrcp.pop %v842
    %v865 = vrcp.pop %v845
    %v866 = vrcp.pop %v848
    %v867 = vrcp.pop %v851
    %v868 = vrcp.pop %v854
    %v869 = vrcp.pop %v857
    %v870 = vrcp.pop %v860
    %v871 = vrcp.pop %v863
    %v872 = vmul.f32 %v825, %v864
    %v873 = vmul.f32 %v827, %v865
    %v874 = vmul.f32 %v829, %v866
    %v875 = vmul.f32 %v831, %v867
    %v876 = vmul.f32 %v833, %v868
    %v877 = vmul.f32 %v835, %v869
    %v878 = vmul.f32 %v837, %v870
    %v879 = vmul.f32 %v839, %v871
    %v880 = vpack.c.bf16 %v873, %v872
    %v881 = vpack.c.bf16 %v875, %v874
    %v882 = vpack.c.bf16 %v877, %v876
    %v883 = vpack.c.bf16 %v879, %v878
    %v884 = vpack.c.bf16 %v643, %v641
    %v885 = vpack.c.bf16 %v648, %v646
    %v886 = vpack.c.bf16 %v653, %v651
    %v887 = vpack.c.bf16 %v658, %v656
    %v888 = vperm.slane %v226, 6
    %v890 = vsel %vm268, %v880, 0
    %v893 = vsel %vm268, %v881, 0
    %v896 = vsel %vm268, %v882, 0
    %v899 = vsel %vm268, %v883, 0
    %901 = vmatpush.bf16.msra.mxu0 0
    %902 = vmatpush.bf16.msra.mxu0 0
    %903 = vmatpush.bf16.msra.mxu0 0
    %904 = vmatpush.bf16.msra.mxu0 0
    %905 = vmatpush.bf16.msra.mxu0 %v887
    %906 = vmatpush.bf16.msra.mxu0 %v886
    %907 = vmatpush.bf16.msra.mxu0 %v885
    %908 = vmatpush.bf16.msra.mxu0 %v884
    %909 = vmatmul.bf16.gmra.mxu0 %v890
    %v910 = vpop.f32.mrf.mxu0
    %v911 = vadd.f32 %v888, %v910
    %v912 = vpop.f32.mrf.mxu0
    %v913 = vadd.f32 %v888, %v912
    %914 = vmatmul.bf16.gmra.mxu0 %v893
    %v915 = vpop.f32.mrf.mxu0
    %v916 = vadd.f32 %v888, %v915
    %v917 = vpop.f32.mrf.mxu0
    %v918 = vadd.f32 %v888, %v917
    %919 = vmatmul.bf16.gmra.mxu0 %v896
    %v920 = vpop.f32.mrf.mxu0
    %v921 = vadd.f32 %v888, %v920
    %v922 = vpop.f32.mrf.mxu0
    %v923 = vadd.f32 %v888, %v922
    %924 = vmatmul.bf16.gmra.mxu0 %v899
    %v925 = vpop.f32.mrf.mxu0
    %v926 = vadd.f32 %v888, %v925
    %v927 = vpop.f32.mrf.mxu0
    %v928 = vadd.f32 %v888, %v927
    %929 = vdwg.mxu0
    %v930 = vld [vmem:[#allocation7] sm:$0xf]
    %v931 = vpack.c.bf16 %v913, %v911
    %v932 = vpack.c.bf16 %v918, %v916
    %v933 = vpack.c.bf16 %v923, %v921
    %v934 = vpack.c.bf16 %v928, %v926
    %v936 = vsel %vm268, %v930, 0
    %938 = vmatpush.bf16.msra.mxu0 0
    %939 = vmatpush.bf16.msra.mxu0 0
    %940 = vmatpush.bf16.msra.mxu0 0
    %941 = vmatpush.bf16.msra.mxu0 0
    %942 = vmatpush.bf16.msra.mxu0 %v934
    %943 = vmatpush.bf16.msra.mxu0 %v933
    %944 = vmatpush.bf16.msra.mxu0 %v932
    %945 = vmatpush.bf16.msra.mxu0 %v931
    %946 = vmatmul.bf16.gmra.mxu0 %v936
    %v947 = vpop.f32.mrf.mxu0
    %v948 = vadd.f32 0.0, %v947
    %v949 = vpop.f32.mrf.mxu0
    %950 = vdwg.mxu0
    %v951 = vpack.c.bf16 %v948, %v948
    %v952 = vperm.slane %v226, 7
    %v969 = vunpack.c.l.b16 %v146
    %v970 = vunpack.c.l.b16 %v147
    %v971 = vunpack.c.l.b16 %v148
    %v972 = vunpack.c.l.b16 %v149
    %v973 = vunpack.c.l.b16 %v150
    %v974 = vunpack.c.l.b16 %v151
    %v975 = vunpack.c.l.b16 %v152
    %v976 = vunpack.c.l.b16 %v153
    %v977 = vunpack.c.l.b16 %v154
    %v978 = vunpack.c.l.b16 %v155
    %v979 = vunpack.c.l.b16 %v156
    %v980 = vunpack.c.l.b16 %v157
    %v981 = vunpack.c.l.b16 %v158
    %v982 = vunpack.c.l.b16 %v159
    %v983 = vunpack.c.l.b16 %v160
    %v984 = vunpack.c.l.b16 %v161
    %v985 = vpack.c.b16 %v970, %v969
    %v986 = vpack.c.b16 %v972, %v971
    %v987 = vpack.c.b16 %v974, %v973
    %v988 = vpack.c.b16 %v976, %v975
    %v989 = vpack.c.b16 %v978, %v977
    %v990 = vpack.c.b16 %v980, %v979
    %v991 = vpack.c.b16 %v982, %v981
    %v992 = vpack.c.b16 %v984, %v983
    %1001 = vmatpush.bf16.msra.mxu0 %v992
    %1002 = vmatpush.bf16.msra.mxu0 %v991
    %1003 = vmatpush.bf16.msra.mxu0 %v990
    %1004 = vmatpush.bf16.msra.mxu0 %v989
    %1005 = vmatpush.bf16.msra.mxu0 %v988
    %1006 = vmatpush.bf16.msra.mxu0 %v987
    %1007 = vmatpush.bf16.msra.mxu0 %v986
    %1008 = vmatpush.bf16.msra.mxu0 %v985
    %1009 = vmatmul.bf16.gmra.mxu0 %v951
    %v1010 = vpop.f32.mrf.mxu0
    %v1011 = vadd.f32 %v952, %v1010
    %v1012 = vpop.f32.mrf.mxu0
    %1013 = vdwg.mxu0
    %v1014 = vmax.f32 %v1011, 0.0
    %v1015 = vperm.slane %v227, 0
    %v1032 = vunpack.c.l.b16 %v162
    %v1033 = vunpack.c.l.b16 %v163
    %v1034 = vunpack.c.l.b16 %v164
    %v1035 = vunpack.c.l.b16 %v165
    %v1036 = vunpack.c.l.b16 %v166
    %v1037 = vunpack.c.l.b16 %v167
    %v1038 = vunpack.c.l.b16 %v168
    %v1039 = vunpack.c.l.b16 %v169
    %v1040 = vunpack.c.l.b16 %v170
    %v1041 = vunpack.c.l.b16 %v171
    %v1042 = vunpack.c.l.b16 %v172
    %v1043 = vunpack.c.l.b16 %v173
    %v1044 = vunpack.c.l.b16 %v174
    %v1045 = vunpack.c.l.b16 %v175
    %v1046 = vunpack.c.l.b16 %v176
    %v1047 = vunpack.c.l.b16 %v177
    %v1048 = vpack.c.b16 %v1033, %v1032
    %v1049 = vpack.c.b16 %v1035, %v1034
    %v1050 = vpack.c.b16 %v1037, %v1036
    %v1051 = vpack.c.b16 %v1039, %v1038
    %v1052 = vpack.c.b16 %v1041, %v1040
    %v1053 = vpack.c.b16 %v1043, %v1042
    %v1054 = vpack.c.b16 %v1045, %v1044
    %v1055 = vpack.c.b16 %v1047, %v1046
    %1064 = vmatpush.bf16.msra.mxu0 %v1055
    %1065 = vmatpush.bf16.msra.mxu0 %v1054
    %1066 = vmatpush.bf16.msra.mxu0 %v1053
    %1067 = vmatpush.bf16.msra.mxu0 %v1052
    %1068 = vmatpush.bf16.msra.mxu0 %v1051
    %1069 = vmatpush.bf16.msra.mxu0 %v1050
    %1070 = vmatpush.bf16.msra.mxu0 %v1049
    %1071 = vmatpush.bf16.msra.mxu0 %v1048
    %1072 = vmatmul.bf16.gmra.mxu0 %v951
    %v1073 = vpop.f32.mrf.mxu0
    %v1074 = vadd.f32 %v1015, %v1073
    %v1075 = vpop.f32.mrf.mxu0
    %1076 = vdwg.mxu0
    %v1077 = vmax.f32 %v1074, 0.0
    %v1078 = vpack.c.bf16 %v1014, %v1014
    %v1079 = vpack.c.bf16 %v1077, %v1077
    %v1096 = vunpack.c.l.b16 %v194
    %v1097 = vunpack.c.l.b16 %v195
    %v1098 = vunpack.c.l.b16 %v196
    %v1099 = vunpack.c.l.b16 %v197
    %v1100 = vunpack.c.l.b16 %v198
    %v1101 = vunpack.c.l.b16 %v199
    %v1102 = vunpack.c.l.b16 %v200
    %v1103 = vunpack.c.l.b16 %v201
    %v1104 = vunpack.c.l.b16 %v202
    %v1105 = vunpack.c.l.b16 %v203
    %v1106 = vunpack.c.l.b16 %v204
    %v1107 = vunpack.c.l.b16 %v205
    %v1108 = vunpack.c.l.b16 %v206
    %v1109 = vunpack.c.l.b16 %v207
    %v1110 = vunpack.c.l.b16 %v208
    %v1111 = vunpack.c.l.b16 %v209
    %v1112 = vpack.c.b16 %v1097, %v1096
    %v1113 = vpack.c.b16 %v1099, %v1098
    %v1114 = vpack.c.b16 %v1101, %v1100
    %v1115 = vpack.c.b16 %v1103, %v1102
    %v1116 = vpack.c.b16 %v1105, %v1104
    %v1117 = vpack.c.b16 %v1107, %v1106
    %v1118 = vpack.c.b16 %v1109, %v1108
    %v1119 = vpack.c.b16 %v1111, %v1110
    %1128 = vmatpush.bf16.msra.mxu0 %v1119
    %1129 = vmatpush.bf16.msra.mxu0 %v1118
    %1130 = vmatpush.bf16.msra.mxu0 %v1117
    %1131 = vmatpush.bf16.msra.mxu0 %v1116
    %1132 = vmatpush.bf16.msra.mxu0 %v1115
    %1133 = vmatpush.bf16.msra.mxu0 %v1114
    %1134 = vmatpush.bf16.msra.mxu0 %v1113
    %1135 = vmatpush.bf16.msra.mxu0 %v1112
    %1136 = vmatmul.bf16.gmra.mxu0 %v1079
    %v1137 = vpop.f32.mrf.mxu0
    %v1138 = vadd.f32 0.0, %v1137
    %v1139 = vpop.f32.mrf.mxu0
    %1140 = vdwg.mxu0
    %v1157 = vunpack.c.l.b16 %v178
    %v1158 = vunpack.c.l.b16 %v179
    %v1159 = vunpack.c.l.b16 %v180
    %v1160 = vunpack.c.l.b16 %v181
    %v1161 = vunpack.c.l.b16 %v182
    %v1162 = vunpack.c.l.b16 %v183
    %v1163 = vunpack.c.l.b16 %v184
    %v1164 = vunpack.c.l.b16 %v185
    %v1165 = vunpack.c.l.b16 %v186
    %v1166 = vunpack.c.l.b16 %v187
    %v1167 = vunpack.c.l.b16 %v188
    %v1168 = vunpack.c.l.b16 %v189
    %v1169 = vunpack.c.l.b16 %v190
    %v1170 = vunpack.c.l.b16 %v191
    %v1171 = vunpack.c.l.b16 %v192
    %v1172 = vunpack.c.l.b16 %v193
    %v1173 = vpack.c.b16 %v1158, %v1157
    %v1174 = vpack.c.b16 %v1160, %v1159
    %v1175 = vpack.c.b16 %v1162, %v1161
    %v1176 = vpack.c.b16 %v1164, %v1163
    %v1177 = vpack.c.b16 %v1166, %v1165
    %v1178 = vpack.c.b16 %v1168, %v1167
    %v1179 = vpack.c.b16 %v1170, %v1169
    %v1180 = vpack.c.b16 %v1172, %v1171
    %1189 = vmatpush.bf16.msra.mxu0 %v1180
    %1190 = vmatpush.bf16.msra.mxu0 %v1179
    %1191 = vmatpush.bf16.msra.mxu0 %v1178
    %1192 = vmatpush.bf16.msra.mxu0 %v1177
    %1193 = vmatpush.bf16.msra.mxu0 %v1176
    %1194 = vmatpush.bf16.msra.mxu0 %v1175
    %1195 = vmatpush.bf16.msra.mxu0 %v1174
    %1196 = vmatpush.bf16.msra.mxu0 %v1173
    %1197 = vmatmul.bf16.gmra.mxu0 %v1078
    %v1198 = vpop.f32.mrf.mxu0
    %v1199 = vadd.f32 %v1138, %v1198
    %v1200 = vpop.f32.mrf.mxu0
    %1201 = vdwg.mxu0
    %v1202 = vperm.slane %v227, 1
    %v1203 = vadd.f32 %v1199, %v1202
    %v1204 = vmax.f32 %v1203, 0.0
    %v1205 = vpack.c.bf16 %v1204, %v1204
    %v1206 = vperm.slane %v227, 2
    %v1223 = vunpack.c.l.b16 %v210
    %v1224 = vunpack.c.l.b16 %v211
    %v1225 = vunpack.c.l.b16 %v212
    %v1226 = vunpack.c.l.b16 %v213
    %v1227 = vunpack.c.l.b16 %v214
    %v1228 = vunpack.c.l.b16 %v215
    %v1229 = vunpack.c.l.b16 %v216
    %v1230 = vunpack.c.l.b16 %v217
    %v1231 = vunpack.c.l.b16 %v218
    %v1232 = vunpack.c.l.b16 %v219
    %v1233 = vunpack.c.l.b16 %v220
    %v1234 = vunpack.c.l.b16 %v221
    %v1235 = vunpack.c.l.b16 %v222
    %v1236 = vunpack.c.l.b16 %v223
    %v1237 = vunpack.c.l.b16 %v224
    %v1238 = vunpack.c.l.b16 %v225
    %v1239 = vpack.c.b16 %v1224, %v1223
    %v1240 = vpack.c.b16 %v1226, %v1225
    %v1241 = vpack.c.b16 %v1228, %v1227
    %v1242 = vpack.c.b16 %v1230, %v1229
    %v1243 = vpack.c.b16 %v1232, %v1231
    %v1244 = vpack.c.b16 %v1234, %v1233
    %v1245 = vpack.c.b16 %v1236, %v1235
    %v1246 = vpack.c.b16 %v1238, %v1237
    %1255 = vmatpush.bf16.msra.mxu0 %v1246
    %1256 = vmatpush.bf16.msra.mxu0 %v1245
    %1257 = vmatpush.bf16.msra.mxu0 %v1244
    %1258 = vmatpush.bf16.msra.mxu0 %v1243
    %1259 = vmatpush.bf16.msra.mxu0 %v1242
    %1260 = vmatpush.bf16.msra.mxu0 %v1241
    %1261 = vmatpush.bf16.msra.mxu0 %v1240
    %1262 = vmatpush.bf16.msra.mxu0 %v1239
    %1263 = vmatmul.bf16.gmra.mxu0 %v1205
    %v1264 = vpop.f32.mrf.mxu0
    %v1265 = vadd.f32 %v1206, %v1264
    %v1266 = vpop.f32.mrf.mxu0
    %1267 = vdwg.mxu0
    %1268 = vst [vmem:[#allocation11] sm:$0xff] %v1265
    // Predicated region
    $region42: #{tpu_custom_call.1} parent=1 // pred_check
      _
    $region43: #{tpu_custom_call.1} parent=1 // pred_check_branch
      %1270 = sbr.rel (0) target = $region45
    $region44: #{tpu_custom_call.1} parent=1 // pred_region
      %1272 = vsyncadd [#allocation4], 0
      %s1274 = sshll.u32 [#allocation11], 4
      %s1275 = int_to_ptr.vmem [resolvable:$true] %s1274
      %s1276 = sshll.u32 %s5, 4
      %s1277 = int_to_ptr.hbm [resolvable:$true] %s1276
      %1279 = dma.vmem_to_hbm [thread:$0]  %s1275, 128, %s1277, [#allocation4]
    $region45: #{tpu_custom_call.1} parent=1 // pred_fallthru
      _
    // Predicated region
    $region46: #{tpu_custom_call.1} parent=1 // pred_check
      _
    $region47: #{tpu_custom_call.1} parent=1 // pred_check_branch
      %1281 = sbr.rel (0) target = $region49
    $region48: #{tpu_custom_call.1} parent=1 // pred_region
      %1283 = dma.done [#allocation4], 128
    $region49: #{tpu_custom_call.1} parent=1 // pred_fallthru
      _
    %1284 = vsyncpa [#allocation3], 1
    %1285 = vsyncpa [#allocation6], 1
    %1286 = vsyncpa [#allocation9], 1
    %1287 = vsyncpa [#allocation4], 1

</llo_original>
